<compile_context>
chip_gen: v6e
topology: v6e:2x2x1
jax: 0.10.0
libtpu: 0.0.40
codegen_flags: <defaults>
</compile_context>

<pallas_src>
import functools
import math

import jax
import jax.numpy as jnp
from jax.experimental import pallas as pl
from jax.experimental.pallas import tpu as pltpu


def _round_up(x, m):
    return ((x + m - 1) // m) * m


def _erf_f32(x):
    # Abramowitz & Stegun 7.1.26 rational approximation (|err| < 1.5e-7).
    a1, a2, a3, a4, a5 = (0.254829592, -0.284496736, 1.421413741,
                          -1.453152027, 1.061405429)
    p = 0.3275911
    ax = jnp.abs(x)
    t = 1.0 / (1.0 + p * ax)
    poly = ((((a5 * t + a4) * t + a3) * t + a2) * t + a1) * t
    y = 1.0 - poly * jnp.exp(-ax * ax)
    return jnp.where(x < 0.0, -y, y)


def _gelu_f32(x):
    # Exact (erf-based) GELU, matching the reference torch implementation.
    return x * 0.5 * (1.0 + _erf_f32(x * 0.7071067811865475))


# ----------------------------------------------------------------------------
# MLM prediction head: dense + GELU + LayerNorm [+ projection] + decoder.
# ----------------------------------------------------------------------------
def _mlm_head_kernel(*refs, ln_eps, has_projection):
    if has_projection:
        (x_ref, wdT_ref, bd_ref, g_ref, beta_ref, wpT_ref,
         wdecT_ref, bdec_ref, o_ref, t_ref) = refs
    else:
        (x_ref, wdT_ref, bd_ref, g_ref, beta_ref,
         wdecT_ref, bdec_ref, o_ref, t_ref) = refs
        wpT_ref = None

    # The transform depends only on the row tile -> compute once per row tile
    # (first vocab step) and keep it resident in VMEM scratch.
    # (If a trace ever shows an MXU bubble at j==0, this branch can be split
    #  into its own 1-D pallas_call that writes [M, E] bf16 to HBM.)
    @pl.when(pl.program_id(1) == 0)
    def _():
        h = jnp.dot(x_ref[...], wdT_ref[...],
                    preferred_element_type=jnp.float32) + bd_ref[...]
        h = _gelu_f32(h)
        mu = jnp.mean(h, axis=-1, keepdims=True)
        var = jnp.mean(jnp.square(h - mu), axis=-1, keepdims=True)
        h = (h - mu) * jax.lax.rsqrt(var + ln_eps)
        h = h * g_ref[...] + beta_ref[...]
        if has_projection:
            # Factorized H -> E projection (bias-free), kept inside the
            # kernel so the decoder weight streams as [E, TV], not [H, TV].
            h = jnp.dot(h.astype(t_ref.dtype), wpT_ref[...],
                        preferred_element_type=jnp.float32)
        t_ref[...] = h.astype(t_ref.dtype)

    acc = jnp.dot(t_ref[...], wdecT_ref[...],
                  preferred_element_type=jnp.float32)
    o_ref[...] = (acc + bdec_ref[...]).astype(o_ref.dtype)


def _mlm_pallas_call(x_c, wdT, bd, g, beta, wpT, wdecT, bdec, *,
                     H, E, TM, TV, M_pad, V_pad, ln_eps, cd, out_dtype, cost,
                     single_buffer_invariants):
    has_projection = wpT is not None
    inv = {}
    if single_buffer_invariants:
        # Grid-invariant operands: no second pipeline buffer needed.
        inv = dict(pipeline_mode=pl.Buffered(1))

    in_specs = [
        pl.BlockSpec((TM, H), lambda i, j: (i, 0)),
        pl.BlockSpec((H, H), lambda i, j: (0, 0), **inv),
        pl.BlockSpec((1, H), lambda i, j: (0, 0), **inv),
        pl.BlockSpec((1, H), lambda i, j: (0, 0), **inv),
        pl.BlockSpec((1, H), lambda i, j: (0, 0), **inv),
    ]
    args = [x_c, wdT, bd, g, beta]
    if has_projection:
        in_specs.append(pl.BlockSpec((H, E), lambda i, j: (0, 0), **inv))
        args.append(wpT)
    in_specs += [
        pl.BlockSpec((E, TV), lambda i, j: (0, j)),
        pl.BlockSpec((1, TV), lambda i, j: (0, j)),
    ]
    args += [wdecT, bdec]

    return pl.pallas_call(
        functools.partial(_mlm_head_kernel, ln_eps=float(ln_eps),
                          has_projection=has_projection),
        out_shape=jax.ShapeDtypeStruct((M_pad, V_pad), out_dtype),
        grid=(M_pad // TM, V_pad // TV),
        in_specs=in_specs,
        out_specs=pl.BlockSpec((TM, TV), lambda i, j: (i, j)),
        scratch_shapes=[pltpu.VMEM((TM, E), cd)],
        compiler_params=pltpu.CompilerParams(
            dimension_semantics=("parallel", "arbitrary"),
            vmem_limit_bytes=32 * 1024 * 1024),
        cost_estimate=cost,
    )(*args)


def bert_lm_prediction_head(sequence_output, dense_w, dense_b, ln_gamma,
                            ln_beta, decoder_w, decoder_bias, *,
                            project_w=None, ln_eps=1e-12,
                            compute_dtype=jnp.bfloat16,
                            out_dtype=jnp.bfloat16,
                            row_tile_cap=512,       # raise to 1024-2048 on v6e
                            vocab_tile_cap=512):
    """sequence_output: [..., H]; dense_w: [H,H]; decoder_w: [V,E] -> [..., V]."""
    lead_shape = sequence_output.shape[:-1]
    H = sequence_output.shape[-1]
    x = sequence_output.reshape(-1, H)
    M = x.shape[0]
    V, E = decoder_w.shape
    has_projection = project_w is not None
    if not has_projection:
        assert E == H, "without a projection layer decoder_w must be [V, H]"

    cd = jnp.dtype(compute_dtype)
    sub = 8 * max(1, 4 // cd.itemsize)               # 8 for f32, 16 for bf16

    # Tile selection + padding: never fall back to full-dimension blocks.
    TM = min(_round_up(M, sub), _round_up(row_tile_cap, sub))
    M_pad = _round_up(M, TM)
    TV = min(_round_up(V, 128), _round_up(vocab_tile_cap, 128))
    V_pad = _round_up(V, TV)                          # e.g. 30522 -> 30720

    x_c = x.astype(cd)
    if M_pad != M:
        x_c = jnp.pad(x_c, ((0, M_pad - M), (0, 0)))
    wdT = dense_w.T.astype(cd)                        # [H, H]
    bd = dense_b.astype(jnp.float32).reshape(1, H)
    g = ln_gamma.astype(jnp.float32).reshape(1, H)
    beta = ln_beta.astype(jnp.float32).reshape(1, H)
    wpT = project_w.T.astype(cd) if has_projection else None     # [H, E]
    wdecT = decoder_w.T.astype(cd)                    # [E, V]
    bdec = decoder_bias.astype(jnp.float32).reshape(1, V)
    if V_pad != V:
        wdecT = jnp.pad(wdecT, ((0, 0), (0, V_pad - V)))
        bdec = jnp.pad(bdec, ((0, 0), (0, V_pad - V)))

    out_item = jnp.dtype(out_dtype).itemsize
    n_row_tiles = M_pad // TM
    flops = 2 * M_pad * H * H + 2 * M_pad * E * V_pad
    if has_projection:
        flops += 2 * M_pad * H * E
    cost = pl.CostEstimate(
        flops=int(flops),
        transcendentals=int(M_pad * H),               # exp inside the erf approx
        bytes_accessed=int(
            (M_pad * H + H * H + (H * E if has_projection else 0)) * cd.itemsize
            + n_row_tiles * E * V_pad * cd.itemsize   # decoder weight re-streamed
            + M_pad * V_pad * out_item),
    )

    kwargs = dict(H=H, E=E, TM=TM, TV=TV, M_pad=M_pad, V_pad=V_pad,
                  ln_eps=ln_eps, cd=cd, out_dtype=out_dtype, cost=cost)
    try:
        out = _mlm_pallas_call(x_c, wdT, bd, g, beta, wpT, wdecT, bdec,
                               single_buffer_invariants=True, **kwargs)
    except Exception:
        # This jax build does not support pipeline_mode=pl.Buffered(1);
        # fall back to default double-buffering for the invariant operands.
        out = _mlm_pallas_call(x_c, wdT, bd, g, beta, wpT, wdecT, bdec,
                               single_buffer_invariants=False, **kwargs)

    if M_pad != M or V_pad != V:
        out = out[:M, :V]
    return out.reshape(lead_shape + (V,))


# ----------------------------------------------------------------------------
# NSP head: Linear(hidden_size, 2).
# Per the perf review this op is 2*B*H*2 FLOPs (sub-microsecond); a pallas_call
# launch plus per-grid-step overhead exceeds the op itself and the previously
# 128-lane-padded matmul did 64x redundant MXU work.  Leave it to XLA to fuse.
# ----------------------------------------------------------------------------
def bert_nsp_head(pooled_output, weight, bias):
    """pooled_output: [B, H]; weight: [2, H]; bias: [2] -> [B, 2] (f32)."""
    x = pooled_output.astype(jnp.float32)
    return jnp.dot(x, weight.T.astype(jnp.float32)) + bias.astype(jnp.float32)


# ----------------------------------------------------------------------------
# Full module forward: (prediction_scores, seq_relationship_score)
# ----------------------------------------------------------------------------
def bert_pretraining_heads(sequence_output, pooled_output, params, *,
                           compute_dtype=jnp.bfloat16, out_dtype=jnp.bfloat16):
    prediction_scores = bert_lm_prediction_head(
        sequence_output,
        params["dense_w"], params["dense_b"],
        params["ln_gamma"], params["ln_beta"],
        params["decoder_w"], params["decoder_bias"],
        project_w=params.get("project_w"),
        ln_eps=params.get("ln_eps", 1e-12),
        compute_dtype=compute_dtype, out_dtype=out_dtype,
    )
    seq_relationship_score = bert_nsp_head(
        pooled_output, params["nsp_w"], params["nsp_b"])
    return prediction_scores, seq_relationship_score


# ----------------------------------------------------------------------------
# Pure-JAX reference (mirrors the kernel's bf16 operand casts).
# ----------------------------------------------------------------------------
def _reference(sequence_output, pooled_output, params, compute_dtype):
    cd = jnp.dtype(compute_dtype)
    H = sequence_output.shape[-1]
    x = sequence_output.reshape(-1, H).astype(cd)
    h = jnp.dot(x, params["dense_w"].T.astype(cd),
                preferred_element_type=jnp.float32) + params["dense_b"]
    h = h * 0.5 * (1.0 + jax.scipy.special.erf(h / math.sqrt(2.0)))
    mu = jnp.mean(h, axis=-1, keepdims=True)
    var = jnp.mean(jnp.square(h - mu), axis=-1, keepdims=True)
    h = (h - mu) * jax.lax.rsqrt(var + params.get("ln_eps", 1e-12))
    h = h * params["ln_gamma"] + params["ln_beta"]
    if params.get("project_w") is not None:
        h = jnp.dot(h.astype(cd), params["project_w"].T.astype(cd),
                    preferred_element_type=jnp.float32)
    scores = jnp.dot(h.astype(cd), params["decoder_w"].T.astype(cd),
                     preferred_element_type=jnp.float32) + params["decoder_bias"]
    V = params["decoder_w"].shape[0]
    scores = scores.reshape(sequence_output.shape[:-1] + (V,))
    nsp = jnp.dot(pooled_output.astype(jnp.float32),
                  params["nsp_w"].T.astype(jnp.float32)) + params["nsp_b"]
    return scores, nsp


if __name__ == "__main__":
    key = jax.random.PRNGKey(0)
    keys = jax.random.split(key, 10)

    # Small shapes consistent with the module (embedding_size == hidden_size,
    # so the optional projection layer is None, matching that config branch).
    batch, seq, hidden, vocab = 2, 8, 32, 128

    sequence_output = jax.random.normal(keys[0], (batch, seq, hidden),
                                        dtype=jnp.float32)
    pooled_output = jax.random.normal(keys[1], (batch, hidden),
                                      dtype=jnp.float32)

    params = {
        "dense_w": 0.02 * jax.random.normal(keys[2], (hidden, hidden), jnp.float32),
        "dense_b": 0.02 * jax.random.normal(keys[3], (hidden,), jnp.float32),
        "ln_gamma": jnp.ones((hidden,), jnp.float32),
        "ln_beta": jnp.zeros((hidden,), jnp.float32),
        "decoder_w": 0.02 * jax.random.normal(keys[4], (vocab, hidden), jnp.float32),
        "decoder_bias": jnp.zeros((vocab,), jnp.float32),   # nn.Parameter(zeros)
        "nsp_w": 0.02 * jax.random.normal(keys[5], (2, hidden), jnp.float32),
        "nsp_b": 0.02 * jax.random.normal(keys[6], (2,), jnp.float32),
        "project_w": None,
        "ln_eps": 1e-12,
    }

    pred, nsp = bert_pretraining_heads(sequence_output, pooled_output, params)
    pred = jax.block_until_ready(pred)
    nsp = jax.block_until_ready(nsp)
    ref_pred, ref_nsp = _reference(sequence_output, pooled_output, params,
                                   jnp.bfloat16)

    assert pred.shape == (batch, seq, vocab)
    assert nsp.shape == (batch, 2)
    assert jnp.allclose(pred.astype(jnp.float32), ref_pred, atol=5e-3, rtol=5e-2)
    assert jnp.allclose(nsp, ref_nsp, atol=1e-5, rtol=1e-5)

    # ALBERT-style factorized config (hidden != embedding -> projection layer),
    # exercises the in-kernel H -> E projection branch.
    embedding = 16
    params2 = dict(params)
    params2["project_w"] = 0.5 * jax.random.normal(keys[7], (embedding, hidden),
                                                   jnp.float32)
    params2["decoder_w"] = 0.02 * jax.random.normal(keys[8], (vocab, embedding),
                                                    jnp.float32)
    pred2, _ = bert_pretraining_heads(sequence_output, pooled_output, params2)
    pred2 = jax.block_until_ready(pred2)
    ref_pred2, _ = _reference(sequence_output, pooled_output, params2,
                              jnp.bfloat16)
    assert pred2.shape == (batch, seq, vocab)
    assert jnp.allclose(pred2.astype(jnp.float32), ref_pred2, atol=5e-3, rtol=5e-2)

    print("KERNEL_OK")
</pallas_src>

<mosaic_0001>
module attributes {stable_mosaic.version = 11 : i64} {
  func.func @_mlm_head_kernel(%arg0: i32, %arg1: i32, %arg2: memref<16x32xbf16, #tpu.memory_space<vmem>>, %arg3: memref<32x32xbf16, #tpu.memory_space<vmem>>, %arg4: memref<1x32xf32, #tpu.memory_space<vmem>>, %arg5: memref<1x32xf32, #tpu.memory_space<vmem>>, %arg6: memref<1x32xf32, #tpu.memory_space<vmem>>, %arg7: memref<32x128xbf16, #tpu.memory_space<vmem>>, %arg8: memref<1x128xf32, #tpu.memory_space<vmem>>, %arg9: memref<16x128xbf16, #tpu.memory_space<vmem>>, %arg10: memref<16x32xbf16, #tpu.memory_space<vmem>>) attributes {dimension_semantics = [#tpu.dimension_semantics<parallel>, #tpu.dimension_semantics<arbitrary>], iteration_bounds = array<i64: 1, 1>, scalar_prefetch = 0 : i64, scratch_operands = 1 : i64, tpu.core_type = #tpu.core_type<tc>, window_params = [{transform_indices = @transform_0, window_bounds = array<i64: 16, 32>}, {pipeline_mode = #tpu.pipeline_mode<synchronous>, transform_indices = @transform_1, window_bounds = array<i64: 32, 32>}, {pipeline_mode = #tpu.pipeline_mode<synchronous>, transform_indices = @transform_2, window_bounds = array<i64: 1, 32>}, {pipeline_mode = #tpu.pipeline_mode<synchronous>, transform_indices = @transform_3, window_bounds = array<i64: 1, 32>}, {pipeline_mode = #tpu.pipeline_mode<synchronous>, transform_indices = @transform_4, window_bounds = array<i64: 1, 32>}, {transform_indices = @transform_5, window_bounds = array<i64: 32, 128>}, {transform_indices = @transform_6, window_bounds = array<i64: 1, 128>}, {transform_indices = @transform_7, window_bounds = array<i64: 16, 128>}]} {
    %c0_i32 = arith.constant 0 : i32
    %0 = arith.cmpi eq, %arg1, %c0_i32 : i32
    %1 = arith.extui %0 : i1 to i32
    %c0_i32_0 = arith.constant 0 : i32
    %2 = arith.cmpi ne, %1, %c0_i32_0 : i32
    scf.if %2 {
      %c0_8 = arith.constant 0 : index
      %c0_9 = arith.constant 0 : index
      %11 = vector.load %arg2[%c0_8, %c0_9] : memref<16x32xbf16, #tpu.memory_space<vmem>>, vector<16x32xbf16>
      %c0_10 = arith.constant 0 : index
      %c0_11 = arith.constant 0 : index
      %12 = vector.load %arg3[%c0_10, %c0_11] : memref<32x32xbf16, #tpu.memory_space<vmem>>, vector<32x32xbf16>
      %cst_12 = arith.constant dense<0.000000e+00> : vector<16x32xf32>
      %13 = tpu.matmul %11, %12, %cst_12 {dimension_numbers = #tpu.dot_dimension_numbers<[1], [0], [0], [1], [0, 0, 1, 1], [], []>} : vector<16x32xbf16>, vector<32x32xbf16>, vector<16x32xf32> -> vector<16x32xf32>
      %c0_13 = arith.constant 0 : index
      %c0_14 = arith.constant 0 : index
      %14 = vector.load %arg4[%c0_13, %c0_14] : memref<1x32xf32, #tpu.memory_space<vmem>>, vector<1x32xf32>
      %15 = vector.broadcast %14 : vector<1x32xf32> to vector<16x32xf32>
      %16 = arith.addf %13, %15 : vector<16x32xf32>
      %cst_15 = arith.constant 5.000000e-01 : f32
      %17 = vector.broadcast %cst_15 : f32 to vector<16x32xf32>
      %18 = arith.mulf %16, %17 : vector<16x32xf32>
      %cst_16 = arith.constant 0.707106769 : f32
      %19 = vector.broadcast %cst_16 : f32 to vector<16x32xf32>
      %20 = arith.mulf %16, %19 : vector<16x32xf32>
      %21 = math.absf %20 : vector<16x32xf32>
      %cst_17 = arith.constant 0.327591091 : f32
      %22 = vector.broadcast %cst_17 : f32 to vector<16x32xf32>
      %23 = arith.mulf %22, %21 : vector<16x32xf32>
      %cst_18 = arith.constant 1.000000e+00 : f32
      %24 = vector.broadcast %cst_18 : f32 to vector<16x32xf32>
      %25 = arith.addf %24, %23 : vector<16x32xf32>
      %cst_19 = arith.constant 1.000000e+00 : f32
      %26 = vector.broadcast %cst_19 : f32 to vector<16x32xf32>
      %27 = arith.divf %26, %25 : vector<16x32xf32>
      %cst_20 = arith.constant 1.06140542 : f32
      %28 = vector.broadcast %cst_20 : f32 to vector<16x32xf32>
      %29 = arith.mulf %28, %27 : vector<16x32xf32>
      %cst_21 = arith.constant -1.45315206 : f32
      %30 = vector.broadcast %cst_21 : f32 to vector<16x32xf32>
      %31 = arith.addf %29, %30 : vector<16x32xf32>
      %32 = arith.mulf %31, %27 : vector<16x32xf32>
      %cst_22 = arith.constant 1.42141378 : f32
      %33 = vector.broadcast %cst_22 : f32 to vector<16x32xf32>
      %34 = arith.addf %32, %33 : vector<16x32xf32>
      %35 = arith.mulf %34, %27 : vector<16x32xf32>
      %cst_23 = arith.constant -0.284496725 : f32
      %36 = vector.broadcast %cst_23 : f32 to vector<16x32xf32>
      %37 = arith.addf %35, %36 : vector<16x32xf32>
      %38 = arith.mulf %37, %27 : vector<16x32xf32>
      %cst_24 = arith.constant 0.254829586 : f32
      %39 = vector.broadcast %cst_24 : f32 to vector<16x32xf32>
      %40 = arith.addf %38, %39 : vector<16x32xf32>
      %41 = arith.mulf %40, %27 : vector<16x32xf32>
      %cst_25 = arith.constant 0.000000e+00 : f32
      %42 = vector.broadcast %cst_25 : f32 to vector<16x32xf32>
      %43 = arith.subf %42, %21 : vector<16x32xf32>
      %44 = arith.mulf %43, %21 : vector<16x32xf32>
      %45 = math.exp %44 : vector<16x32xf32>
      %46 = arith.mulf %41, %45 : vector<16x32xf32>
      %cst_26 = arith.constant 1.000000e+00 : f32
      %47 = vector.broadcast %cst_26 : f32 to vector<16x32xf32>
      %48 = arith.subf %47, %46 : vector<16x32xf32>
      %cst_27 = arith.constant 0.000000e+00 : f32
      %49 = vector.broadcast %cst_27 : f32 to vector<16x32xf32>
      %50 = arith.cmpf olt, %20, %49 : vector<16x32xf32>
      %cst_28 = arith.constant 0.000000e+00 : f32
      %51 = vector.broadcast %cst_28 : f32 to vector<16x32xf32>
      %52 = arith.subf %51, %48 : vector<16x32xf32>
      %53 = arith.select %50, %52, %48 : vector<16x32xi1>, vector<16x32xf32>
      %cst_29 = arith.constant 1.000000e+00 : f32
      %54 = vector.broadcast %cst_29 : f32 to vector<16x32xf32>
      %55 = arith.addf %54, %53 : vector<16x32xf32>
      %56 = arith.mulf %18, %55 : vector<16x32xf32>
      %cst_30 = arith.constant dense<0.000000e+00> : vector<16xf32>
      %57 = vector.multi_reduction <add>, %56, %cst_30 [1] : vector<16x32xf32> to vector<16xf32>
      %58 = vector.shape_cast %57 : vector<16xf32> to vector<16x1xf32>
      %cst_31 = arith.constant 3.200000e+01 : f32
      %59 = vector.broadcast %cst_31 : f32 to vector<16x1xf32>
      %60 = arith.divf %58, %59 : vector<16x1xf32>
      %61 = vector.broadcast %60 : vector<16x1xf32> to vector<16x32xf32>
      %62 = arith.subf %56, %61 : vector<16x32xf32>
      %63 = arith.mulf %62, %62 : vector<16x32xf32>
      %cst_32 = arith.constant dense<0.000000e+00> : vector<16xf32>
      %64 = vector.multi_reduction <add>, %63, %cst_32 [1] : vector<16x32xf32> to vector<16xf32>
      %65 = vector.shape_cast %64 : vector<16xf32> to vector<16x1xf32>
      %cst_33 = arith.constant 3.200000e+01 : f32
      %66 = vector.broadcast %cst_33 : f32 to vector<16x1xf32>
      %67 = arith.divf %65, %66 : vector<16x1xf32>
      %68 = vector.broadcast %60 : vector<16x1xf32> to vector<16x32xf32>
      %69 = arith.subf %56, %68 : vector<16x32xf32>
      %cst_34 = arith.constant 9.99999996E-13 : f32
      %70 = vector.broadcast %cst_34 : f32 to vector<16x1xf32>
      %71 = arith.addf %67, %70 : vector<16x1xf32>
      %72 = math.rsqrt %71 : vector<16x1xf32>
      %73 = vector.broadcast %72 : vector<16x1xf32> to vector<16x32xf32>
      %74 = arith.mulf %69, %73 : vector<16x32xf32>
      %c0_35 = arith.constant 0 : index
      %c0_36 = arith.constant 0 : index
      %75 = vector.load %arg5[%c0_35, %c0_36] : memref<1x32xf32, #tpu.memory_space<vmem>>, vector<1x32xf32>
      %76 = vector.broadcast %75 : vector<1x32xf32> to vector<16x32xf32>
      %77 = arith.mulf %74, %76 : vector<16x32xf32>
      %c0_37 = arith.constant 0 : index
      %c0_38 = arith.constant 0 : index
      %78 = vector.load %arg6[%c0_37, %c0_38] : memref<1x32xf32, #tpu.memory_space<vmem>>, vector<1x32xf32>
      %79 = vector.broadcast %78 : vector<1x32xf32> to vector<16x32xf32>
      %80 = arith.addf %77, %79 : vector<16x32xf32>
      %81 = arith.truncf %80 : vector<16x32xf32> to vector<16x32xbf16>
      %c0_39 = arith.constant 0 : index
      %c0_40 = arith.constant 0 : index
      %82 = vector.load %arg10[%c0_39, %c0_40] : memref<16x32xbf16, #tpu.memory_space<vmem>>, vector<16x32xbf16>
      tpu.vector_store %arg10[%c0_39, %c0_40], %81 {strides = array<i32>} : memref<16x32xbf16, #tpu.memory_space<vmem>>, vector<16x32xbf16>,
    } else {
    }
    %c0 = arith.constant 0 : index
    %c0_1 = arith.constant 0 : index
    %3 = vector.load %arg10[%c0, %c0_1] : memref<16x32xbf16, #tpu.memory_space<vmem>>, vector<16x32xbf16>
    %c0_2 = arith.constant 0 : index
    %c0_3 = arith.constant 0 : index
    %4 = vector.load %arg7[%c0_2, %c0_3] : memref<32x128xbf16, #tpu.memory_space<vmem>>, vector<32x128xbf16>
    %cst = arith.constant dense<0.000000e+00> : vector<16x128xf32>
    %5 = tpu.matmul %3, %4, %cst {dimension_numbers = #tpu.dot_dimension_numbers<[1], [0], [0], [1], [0, 0, 1, 1], [], []>} : vector<16x32xbf16>, vector<32x128xbf16>, vector<16x128xf32> -> vector<16x128xf32>
    %c0_4 = arith.constant 0 : index
    %c0_5 = arith.constant 0 : index
    %6 = vector.load %arg8[%c0_4, %c0_5] : memref<1x128xf32, #tpu.memory_space<vmem>>, vector<1x128xf32>
    %7 = vector.broadcast %6 : vector<1x128xf32> to vector<16x128xf32>
    %8 = arith.addf %5, %7 : vector<16x128xf32>
    %9 = arith.truncf %8 : vector<16x128xf32> to vector<16x128xbf16>
    %c0_6 = arith.constant 0 : index
    %c0_7 = arith.constant 0 : index
    %10 = vector.load %arg9[%c0_6, %c0_7] : memref<16x128xbf16, #tpu.memory_space<vmem>>, vector<16x128xbf16>
    tpu.vector_store %arg9[%c0_6, %c0_7], %9 {strides = array<i32>} : memref<16x128xbf16, #tpu.memory_space<vmem>>, vector<16x128xbf16>,
    return
  }
  func.func @transform_0(%arg0: i32, %arg1: i32) -> (i32, i32) {
    %c0_i32 = arith.constant 0 : i32
    %c0_i32_0 = arith.constant 0 : i32
    return %arg0, %c0_i32 : i32, i32
  }
  func.func @transform_1(%arg0: i32, %arg1: i32) -> (i32, i32) {
    %c0_i32 = arith.constant 0 : i32
    %c0_i32_0 = arith.constant 0 : i32
    %c0_i32_1 = arith.constant 0 : i32
    return %c0_i32, %c0_i32_0 : i32, i32
  }
  func.func @transform_2(%arg0: i32, %arg1: i32) -> (i32, i32) {
    %c0_i32 = arith.constant 0 : i32
    %c0_i32_0 = arith.constant 0 : i32
    %c0_i32_1 = arith.constant 0 : i32
    return %c0_i32, %c0_i32_0 : i32, i32
  }
  func.func @transform_3(%arg0: i32, %arg1: i32) -> (i32, i32) {
    %c0_i32 = arith.constant 0 : i32
    %c0_i32_0 = arith.constant 0 : i32
    %c0_i32_1 = arith.constant 0 : i32
    return %c0_i32, %c0_i32_0 : i32, i32
  }
  func.func @transform_4(%arg0: i32, %arg1: i32) -> (i32, i32) {
    %c0_i32 = arith.constant 0 : i32
    %c0_i32_0 = arith.constant 0 : i32
    %c0_i32_1 = arith.constant 0 : i32
    return %c0_i32, %c0_i32_0 : i32, i32
  }
  func.func @transform_5(%arg0: i32, %arg1: i32) -> (i32, i32) {
    %c0_i32 = arith.constant 0 : i32
    %c0_i32_0 = arith.constant 0 : i32
    return %c0_i32, %arg1 : i32, i32
  }
  func.func @transform_6(%arg0: i32, %arg1: i32) -> (i32, i32) {
    %c0_i32 = arith.constant 0 : i32
    %c0_i32_0 = arith.constant 0 : i32
    return %c0_i32, %arg1 : i32, i32
  }
  func.func @transform_7(%arg0: i32, %arg1: i32) -> (i32, i32) {
    %c0_i32 = arith.constant 0 : i32
    return %arg0, %arg1 : i32, i32
  }
}

module attributes {stable_mosaic.version = 11 : i64} {
  func.func @_mlm_head_kernel(%arg0: i32, %arg1: i32, %arg2: memref<16x32xbf16, #tpu.memory_space<vmem>>, %arg3: memref<32x32xbf16, #tpu.memory_space<vmem>>, %arg4: memref<1x32xf32, #tpu.memory_space<vmem>>, %arg5: memref<1x32xf32, #tpu.memory_space<vmem>>, %arg6: memref<1x32xf32, #tpu.memory_space<vmem>>, %arg7: memref<32x128xbf16, #tpu.memory_space<vmem>>, %arg8: memref<1x128xf32, #tpu.memory_space<vmem>>, %arg9: memref<16x128xbf16, #tpu.memory_space<vmem>>, %arg10: memref<16x32xbf16, #tpu.memory_space<vmem>>) attributes {dimension_semantics = [#tpu.dimension_semantics<parallel>, #tpu.dimension_semantics<arbitrary>], iteration_bounds = array<i64: 1, 1>, scalar_prefetch = 0 : i64, scratch_operands = 1 : i64, tpu.core_type = #tpu.core_type<tc>, window_params = [{transform_indices = @transform_0, window_bounds = array<i64: 16, 32>}, {pipeline_mode = #tpu.pipeline_mode<synchronous>, transform_indices = @transform_1, window_bounds = array<i64: 32, 32>}, {pipeline_mode = #tpu.pipeline_mode<synchronous>, transform_indices = @transform_2, window_bounds = array<i64: 1, 32>}, {pipeline_mode = #tpu.pipeline_mode<synchronous>, transform_indices = @transform_3, window_bounds = array<i64: 1, 32>}, {pipeline_mode = #tpu.pipeline_mode<synchronous>, transform_indices = @transform_4, window_bounds = array<i64: 1, 32>}, {transform_indices = @transform_5, window_bounds = array<i64: 32, 128>}, {transform_indices = @transform_6, window_bounds = array<i64: 1, 128>}, {transform_indices = @transform_7, window_bounds = array<i64: 16, 128>}]} {
    %c0_i32 = arith.constant 0 : i32
    %0 = arith.cmpi eq, %arg1, %c0_i32 : i32
    %1 = arith.extui %0 : i1 to i32
    %c0_i32_0 = arith.constant 0 : i32
    %2 = arith.cmpi ne, %1, %c0_i32_0 : i32
    scf.if %2 {
      %c0_8 = arith.constant 0 : index
      %c0_9 = arith.constant 0 : index
      %11 = vector.load %arg2[%c0_8, %c0_9] : memref<16x32xbf16, #tpu.memory_space<vmem>>, vector<16x32xbf16>
      %c0_10 = arith.constant 0 : index
      %c0_11 = arith.constant 0 : index
      %12 = vector.load %arg3[%c0_10, %c0_11] : memref<32x32xbf16, #tpu.memory_space<vmem>>, vector<32x32xbf16>
      %cst_12 = arith.constant dense<0.000000e+00> : vector<16x32xf32>
      %13 = tpu.matmul %11, %12, %cst_12 {dimension_numbers = #tpu.dot_dimension_numbers<[1], [0], [0], [1], [0, 0, 1, 1], [], []>} : vector<16x32xbf16>, vector<32x32xbf16>, vector<16x32xf32> -> vector<16x32xf32>
      %c0_13 = arith.constant 0 : index
      %c0_14 = arith.constant 0 : index
      %14 = vector.load %arg4[%c0_13, %c0_14] : memref<1x32xf32, #tpu.memory_space<vmem>>, vector<1x32xf32>
      %15 = vector.broadcast %14 : vector<1x32xf32> to vector<16x32xf32>
      %16 = arith.addf %13, %15 : vector<16x32xf32>
      %cst_15 = arith.constant 5.000000e-01 : f32
      %17 = vector.broadcast %cst_15 : f32 to vector<16x32xf32>
      %18 = arith.mulf %16, %17 : vector<16x32xf32>
      %cst_16 = arith.constant 0.707106769 : f32
      %19 = vector.broadcast %cst_16 : f32 to vector<16x32xf32>
      %20 = arith.mulf %16, %19 : vector<16x32xf32>
      %21 = math.absf %20 : vector<16x32xf32>
      %cst_17 = arith.constant 0.327591091 : f32
      %22 = vector.broadcast %cst_17 : f32 to vector<16x32xf32>
      %23 = arith.mulf %22, %21 : vector<16x32xf32>
      %cst_18 = arith.constant 1.000000e+00 : f32
      %24 = vector.broadcast %cst_18 : f32 to vector<16x32xf32>
      %25 = arith.addf %24, %23 : vector<16x32xf32>
      %cst_19 = arith.constant 1.000000e+00 : f32
      %26 = vector.broadcast %cst_19 : f32 to vector<16x32xf32>
      %27 = arith.divf %26, %25 : vector<16x32xf32>
      %cst_20 = arith.constant 1.06140542 : f32
      %28 = vector.broadcast %cst_20 : f32 to vector<16x32xf32>
      %29 = arith.mulf %28, %27 : vector<16x32xf32>
      %cst_21 = arith.constant -1.45315206 : f32
      %30 = vector.broadcast %cst_21 : f32 to vector<16x32xf32>
      %31 = arith.addf %29, %30 : vector<16x32xf32>
      %32 = arith.mulf %31, %27 : vector<16x32xf32>
      %cst_22 = arith.constant 1.42141378 : f32
      %33 = vector.broadcast %cst_22 : f32 to vector<16x32xf32>
      %34 = arith.addf %32, %33 : vector<16x32xf32>
      %35 = arith.mulf %34, %27 : vector<16x32xf32>
      %cst_23 = arith.constant -0.284496725 : f32
      %36 = vector.broadcast %cst_23 : f32 to vector<16x32xf32>
      %37 = arith.addf %35, %36 : vector<16x32xf32>
      %38 = arith.mulf %37, %27 : vector<16x32xf32>
      %cst_24 = arith.constant 0.254829586 : f32
      %39 = vector.broadcast %cst_24 : f32 to vector<16x32xf32>
      %40 = arith.addf %38, %39 : vector<16x32xf32>
      %41 = arith.mulf %40, %27 : vector<16x32xf32>
      %cst_25 = arith.constant 0.000000e+00 : f32
      %42 = vector.broadcast %cst_25 : f32 to vector<16x32xf32>
      %43 = arith.subf %42, %21 : vector<16x32xf32>
      %44 = arith.mulf %43, %21 : vector<16x32xf32>
      %45 = math.exp %44 : vector<16x32xf32>
      %46 = arith.mulf %41, %45 : vector<16x32xf32>
      %cst_26 = arith.constant 1.000000e+00 : f32
      %47 = vector.broadcast %cst_26 : f32 to vector<16x32xf32>
      %48 = arith.subf %47, %46 : vector<16x32xf32>
      %cst_27 = arith.constant 0.000000e+00 : f32
      %49 = vector.broadcast %cst_27 : f32 to vector<16x32xf32>
      %50 = arith.cmpf olt, %20, %49 : vector<16x32xf32>
      %cst_28 = arith.constant 0.000000e+00 : f32
      %51 = vector.broadcast %cst_28 : f32 to vector<16x32xf32>
      %52 = arith.subf %51, %48 : vector<16x32xf32>
      %53 = arith.select %50, %52, %48 : vector<16x32xi1>, vector<16x32xf32>
      %cst_29 = arith.constant 1.000000e+00 : f32
      %54 = vector.broadcast %cst_29 : f32 to vector<16x32xf32>
      %55 = arith.addf %54, %53 : vector<16x32xf32>
      %56 = arith.mulf %18, %55 : vector<16x32xf32>
      %cst_30 = arith.constant dense<0.000000e+00> : vector<16xf32>
      %57 = vector.multi_reduction <add>, %56, %cst_30 [1] : vector<16x32xf32> to vector<16xf32>
      %58 = vector.shape_cast %57 : vector<16xf32> to vector<16x1xf32>
      %cst_31 = arith.constant 3.200000e+01 : f32
      %59 = vector.broadcast %cst_31 : f32 to vector<16x1xf32>
      %60 = arith.divf %58, %59 : vector<16x1xf32>
      %61 = vector.broadcast %60 : vector<16x1xf32> to vector<16x32xf32>
      %62 = arith.subf %56, %61 : vector<16x32xf32>
      %63 = arith.mulf %62, %62 : vector<16x32xf32>
      %cst_32 = arith.constant dense<0.000000e+00> : vector<16xf32>
      %64 = vector.multi_reduction <add>, %63, %cst_32 [1] : vector<16x32xf32> to vector<16xf32>
      %65 = vector.shape_cast %64 : vector<16xf32> to vector<16x1xf32>
      %cst_33 = arith.constant 3.200000e+01 : f32
      %66 = vector.broadcast %cst_33 : f32 to vector<16x1xf32>
      %67 = arith.divf %65, %66 : vector<16x1xf32>
      %68 = vector.broadcast %60 : vector<16x1xf32> to vector<16x32xf32>
      %69 = arith.subf %56, %68 : vector<16x32xf32>
      %cst_34 = arith.constant 9.99999996E-13 : f32
      %70 = vector.broadcast %cst_34 : f32 to vector<16x1xf32>
      %71 = arith.addf %67, %70 : vector<16x1xf32>
      %72 = math.rsqrt %71 : vector<16x1xf32>
      %73 = vector.broadcast %72 : vector<16x1xf32> to vector<16x32xf32>
      %74 = arith.mulf %69, %73 : vector<16x32xf32>
      %c0_35 = arith.constant 0 : index
      %c0_36 = arith.constant 0 : index
      %75 = vector.load %arg5[%c0_35, %c0_36] : memref<1x32xf32, #tpu.memory_space<vmem>>, vector<1x32xf32>
      %76 = vector.broadcast %75 : vector<1x32xf32> to vector<16x32xf32>
      %77 = arith.mulf %74, %76 : vector<16x32xf32>
      %c0_37 = arith.constant 0 : index
      %c0_38 = arith.constant 0 : index
      %78 = vector.load %arg6[%c0_37, %c0_38] : memref<1x32xf32, #tpu.memory_space<vmem>>, vector<1x32xf32>
      %79 = vector.broadcast %78 : vector<1x32xf32> to vector<16x32xf32>
      %80 = arith.addf %77, %79 : vector<16x32xf32>
      %81 = arith.truncf %80 : vector<16x32xf32> to vector<16x32xbf16>
      %c0_39 = arith.constant 0 : index
      %c0_40 = arith.constant 0 : index
      %82 = vector.load %arg10[%c0_39, %c0_40] : memref<16x32xbf16, #tpu.memory_space<vmem>>, vector<16x32xbf16>
      tpu.vector_store %arg10[%c0_39, %c0_40], %81 {strides = array<i32>} : memref<16x32xbf16, #tpu.memory_space<vmem>>, vector<16x32xbf16>,
    } else {
    }
    %c0 = arith.constant 0 : index
    %c0_1 = arith.constant 0 : index
    %3 = vector.load %arg10[%c0, %c0_1] : memref<16x32xbf16, #tpu.memory_space<vmem>>, vector<16x32xbf16>
    %c0_2 = arith.constant 0 : index
    %c0_3 = arith.constant 0 : index
    %4 = vector.load %arg7[%c0_2, %c0_3] : memref<32x128xbf16, #tpu.memory_space<vmem>>, vector<32x128xbf16>
    %cst = arith.constant dense<0.000000e+00> : vector<16x128xf32>
    %5 = tpu.matmul %3, %4, %cst {dimension_numbers = #tpu.dot_dimension_numbers<[1], [0], [0], [1], [0, 0, 1, 1], [], []>} : vector<16x32xbf16>, vector<32x128xbf16>, vector<16x128xf32> -> vector<16x128xf32>
    %c0_4 = arith.constant 0 : index
    %c0_5 = arith.constant 0 : index
    %6 = vector.load %arg8[%c0_4, %c0_5] : memref<1x128xf32, #tpu.memory_space<vmem>>, vector<1x128xf32>
    %7 = vector.broadcast %6 : vector<1x128xf32> to vector<16x128xf32>
    %8 = arith.addf %5, %7 : vector<16x128xf32>
    %9 = arith.truncf %8 : vector<16x128xf32> to vector<16x128xbf16>
    %c0_6 = arith.constant 0 : index
    %c0_7 = arith.constant 0 : index
    %10 = vector.load %arg9[%c0_6, %c0_7] : memref<16x128xbf16, #tpu.memory_space<vmem>>, vector<16x128xbf16>
    tpu.vector_store %arg9[%c0_6, %c0_7], %9 {strides = array<i32>} : memref<16x128xbf16, #tpu.memory_space<vmem>>, vector<16x128xbf16>,
    return
  }
  func.func @transform_0(%arg0: i32, %arg1: i32) -> (i32, i32) {
    %c0_i32 = arith.constant 0 : i32
    %c0_i32_0 = arith.constant 0 : i32
    return %arg0, %c0_i32 : i32, i32
  }
  func.func @transform_1(%arg0: i32, %arg1: i32) -> (i32, i32) {
    %c0_i32 = arith.constant 0 : i32
    %c0_i32_0 = arith.constant 0 : i32
    %c0_i32_1 = arith.constant 0 : i32
    return %c0_i32, %c0_i32_0 : i32, i32
  }
  func.func @transform_2(%arg0: i32, %arg1: i32) -> (i32, i32) {
    %c0_i32 = arith.constant 0 : i32
    %c0_i32_0 = arith.constant 0 : i32
    %c0_i32_1 = arith.constant 0 : i32
    return %c0_i32, %c0_i32_0 : i32, i32
  }
  func.func @transform_3(%arg0: i32, %arg1: i32) -> (i32, i32) {
    %c0_i32 = arith.constant 0 : i32
    %c0_i32_0 = arith.constant 0 : i32
    %c0_i32_1 = arith.constant 0 : i32
    return %c0_i32, %c0_i32_0 : i32, i32
  }
  func.func @transform_4(%arg0: i32, %arg1: i32) -> (i32, i32) {
    %c0_i32 = arith.constant 0 : i32
    %c0_i32_0 = arith.constant 0 : i32
    %c0_i32_1 = arith.constant 0 : i32
    return %c0_i32, %c0_i32_0 : i32, i32
  }
  func.func @transform_5(%arg0: i32, %arg1: i32) -> (i32, i32) {
    %c0_i32 = arith.constant 0 : i32
    %c0_i32_0 = arith.constant 0 : i32
    return %c0_i32, %arg1 : i32, i32
  }
  func.func @transform_6(%arg0: i32, %arg1: i32) -> (i32, i32) {
    %c0_i32 = arith.constant 0 : i32
    %c0_i32_0 = arith.constant 0 : i32
    return %c0_i32, %arg1 : i32, i32
  }
  func.func @transform_7(%arg0: i32, %arg1: i32) -> (i32, i32) {
    %c0_i32 = arith.constant 0 : i32
    return %arg0, %arg1 : i32, i32
  }
}

</mosaic_0001>

<llo_original>
// kernel: tpu_custom_call.1
$region0: #{tpu_custom_call.1}
  #allocation0 [shape = 'u32[]', space=smem, size = 0x4, offset = 0x4, fixed_abs, tag = 'smem constant byte address 0x4 - core index']
  #allocation1 [shape = 'u32[144,128]{1,0:T(1,128)}', space=vmem, size = 0x12000, scoped, tag = 'internal scratch']
  #allocation2 [shape = 'bf16[16,32]{1,0:T(8,128)(2,1)}', space=vmem, size = 0x1000, scoped, tag = 'scratch operand']
  %s0 = inlined_call_operand.hbm [shape: bf16[16,32], index: 0, kind: input, shape index: {}]
  %s1 = inlined_call_operand.hbm [shape: bf16[32,32], index: 1, kind: input, shape index: {}]
  %s2 = inlined_call_operand.vmem [shape: f32[1,32], index: 2, kind: input, shape index: {}]
  %s3 = inlined_call_operand.vmem [shape: f32[1,32], index: 3, kind: input, shape index: {}]
  %s4 = inlined_call_operand.vmem [shape: f32[1,32], index: 4, kind: input, shape index: {}]
  %s5 = inlined_call_operand.hbm [shape: bf16[32,128], index: 5, kind: input, shape index: {}]
  %s6 = inlined_call_operand.vmem [shape: f32[1,128], index: 6, kind: input, shape index: {}]
  %s7 = inlined_call_operand.hbm [shape: bf16[16,128], index: 7, kind: output, shape index: {}]
  %s8 = sld [smem:[#allocation0]]
  $region54: #{tpu_custom_call.1} parent=0
    _
  %s10 = ssub.s32 1, %s8
  %s11 = scalar_select 0, %s10, %s8
  $region1: #{tpu_custom_call.1} parent=0
    #allocation3 [shape = 'u8[4096]{0}', space=vmem, size = 0x1000, scoped, tag = 'input window, operand 0, single buffered']
    #allocation4 [shape = 's32[1]{0}', space=sflag, size = 0x4, scoped, tag = 'scoped memory for tpu_custom_call.1']
    #allocation5 [shape = 's32[1]{0}', space=sflag, size = 0x4, scoped, tag = 'scoped memory for tpu_custom_call.1']
    #allocation6 [shape = 'u8[8192]{0}', space=vmem, size = 0x2000, scoped, tag = 'input window, operand 1, single buffered']
    #allocation7 [shape = 's32[1]{0}', space=sflag, size = 0x4, scoped, tag = 'scoped memory for tpu_custom_call.1']
    #allocation8 [shape = 'u8[8192]{0}', space=vmem, size = 0x2000, scoped, tag = 'input window, operand 5, single buffered']
    #allocation9 [shape = 'u8[4096]{0}', space=vmem, size = 0x1000, scoped, tag = 'output window, operand 0, single buffered']
    %12 = vsyncpa [#allocation4], 0
    %13 = vsyncpa [#allocation7], 0
    %14 = vsyncpa [#allocation5], 0
    // Predicated region
    $region2: #{tpu_custom_call.1} parent=1 // pred_check
      _
    $region3: #{tpu_custom_call.1} parent=1 // pred_check_branch
      %16 = sbr.rel (0) target = $region5
    $region4: #{tpu_custom_call.1} parent=1 // pred_region
      %s18 = ssub.s32 128, 128
      %19 = vsyncadd [#allocation4], %s18
      %s20 = sshll.u32 [#allocation3], 4
      %s21 = int_to_ptr.vmem [resolvable:$true] %s20
      %26 = dma.hbm_to_vmem [thread:$0]  %s0, 128, %s21, [#allocation4], 64, 64, 4
    $region5: #{tpu_custom_call.1} parent=1 // pred_fallthru
      _
    // Predicated region
    $region6: #{tpu_custom_call.1} parent=1 // pred_check
      _
    $region7: #{tpu_custom_call.1} parent=1 // pred_check_branch
      %28 = sbr.rel (0) target = $region9
    $region8: #{tpu_custom_call.1} parent=1 // pred_region
      %s30 = ssub.s32 256, 256
      %31 = vsyncadd [#allocation7], %s30
      %s32 = sshll.u32 [#allocation6], 4
      %s33 = int_to_ptr.vmem [resolvable:$true] %s32
      %38 = dma.hbm_to_vmem [thread:$0]  %s1, 256, %s33, [#allocation7], 64, 64, 4
    $region9: #{tpu_custom_call.1} parent=1 // pred_fallthru
      _
    // Predicated region
    $region10: #{tpu_custom_call.1} parent=1 // pred_check
      _
    $region11: #{tpu_custom_call.1} parent=1 // pred_check_branch
      %40 = sbr.rel (0) target = $region13
    $region12: #{tpu_custom_call.1} parent=1 // pred_region
      _
    $region13: #{tpu_custom_call.1} parent=1 // pred_fallthru
      _
    // Predicated region
    $region14: #{tpu_custom_call.1} parent=1 // pred_check
      _
    $region15: #{tpu_custom_call.1} parent=1 // pred_check_branch
      %42 = sbr.rel (0) target = $region17
    $region16: #{tpu_custom_call.1} parent=1 // pred_region
      _
    $region17: #{tpu_custom_call.1} parent=1 // pred_fallthru
      _
    // Predicated region
    $region18: #{tpu_custom_call.1} parent=1 // pred_check
      _
    $region19: #{tpu_custom_call.1} parent=1 // pred_check_branch
      %44 = sbr.rel (0) target = $region21
    $region20: #{tpu_custom_call.1} parent=1 // pred_region
      _
    $region21: #{tpu_custom_call.1} parent=1 // pred_fallthru
      _
    // Predicated region
    $region22: #{tpu_custom_call.1} parent=1 // pred_check
      _
    $region23: #{tpu_custom_call.1} parent=1 // pred_check_branch
      %46 = sbr.rel (0) target = $region25
    $region24: #{tpu_custom_call.1} parent=1 // pred_region
      %s48 = ssub.s32 256, 256
      %49 = vsyncadd [#allocation7], %s48
      %s50 = sshll.u32 [#allocation8], 4
      %s51 = int_to_ptr.vmem [resolvable:$true] %s50
      %56 = dma.hbm_to_vmem [thread:$0]  %s5, 256, %s51, [#allocation7], 64, 64, 4
    $region25: #{tpu_custom_call.1} parent=1 // pred_fallthru
      _
    // Predicated region
    $region26: #{tpu_custom_call.1} parent=1 // pred_check
      _
    $region27: #{tpu_custom_call.1} parent=1 // pred_check_branch
      %58 = sbr.rel (0) target = $region29
    $region28: #{tpu_custom_call.1} parent=1 // pred_region
      _
    $region29: #{tpu_custom_call.1} parent=1 // pred_fallthru
      _
    // Predicated region
    $region30: #{tpu_custom_call.1} parent=1 // pred_check
      _
    $region31: #{tpu_custom_call.1} parent=1 // pred_check_branch
      %60 = sbr.rel (0) target = $region33
    $region32: #{tpu_custom_call.1} parent=1 // pred_region
      %61 = dma.done [#allocation4], 128
    $region33: #{tpu_custom_call.1} parent=1 // pred_fallthru
      _
    // Predicated region
    $region34: #{tpu_custom_call.1} parent=1 // pred_check
      _
    $region35: #{tpu_custom_call.1} parent=1 // pred_check_branch
      %63 = sbr.rel (0) target = $region37
    $region36: #{tpu_custom_call.1} parent=1 // pred_region
      %64 = dma.done [#allocation7], 256
    $region37: #{tpu_custom_call.1} parent=1 // pred_fallthru
      _
    // Predicated region
    $region38: #{tpu_custom_call.1} parent=1 // pred_check
      _
    $region39: #{tpu_custom_call.1} parent=1 // pred_check_branch
      %66 = sbr.rel (0) target = $region41
    $region40: #{tpu_custom_call.1} parent=1 // pred_region
      %67 = dma.done [#allocation7], 256
    $region41: #{tpu_custom_call.1} parent=1 // pred_fallthru
      _
    %p69 = scmp.eq.s32.totalorder 0, 0
    // Predicated region
    $region42: #{tpu_custom_call.1} parent=1 // pred_check
      %p70 = pneg %p69
    $region43: #{tpu_custom_call.1} parent=1 // pred_check_branch
      %72 = sbr.rel (%p70) target = $region45
    $region44: #{tpu_custom_call.1} parent=1 // pred_region
      %v73 = vld [vmem:[#allocation3] sm:$0xf]
      %v74 = vld [vmem:[#allocation3 + $0x4] sm:$0xf]
      %v75 = vld [vmem:[#allocation6] sm:$0xf]
      %v76 = vld [vmem:[#allocation6 + $0x4] sm:$0xf]
      %v77 = vld [vmem:[#allocation6 + $0x8] sm:$0xf]
      %v78 = vld [vmem:[#allocation6 + $0xc] sm:$0xf]
      %v79 = vld [vmem:[%s2] sm:$0x1]
      %v81 = vlaneseq
      %v82 = vshrl.u32 %v81, 7
      %v83 = vsub.s32 0, %v82
      %v84 = vrot.slane %v79, %v83
      %v88 = vunpack.c.l.b16 %v73
      %v89 = vunpack.c.l.b16 %v74
      %v90 = vpack.c.b16 %v89, %v88
      %v95 = vunpack.c.l.b16 %v75
      %v96 = vunpack.c.l.b16 %v76
      %v97 = vunpack.c.l.b16 %v77
      %v98 = vunpack.c.l.b16 %v78
      %v99 = vpack.c.b16 %v96, %v95
      %v100 = vpack.c.b16 %v98, %v97
      %vm103 = vcmask 261120
      %v105 = vsel %vm103, %v90, 0
      %107 = vmatprep.subr.bf16.mxu0 0
      %108 = vmatpush1.bf16.msra.mxu0 0
      %109 = vmatprep.subr.bf16.mxu0 0
      %110 = vmatpush1.bf16.msra.mxu0 0
      %111 = vmatprep.subr.bf16.mxu0 0
      %112 = vmatpush1.bf16.msra.mxu0 0
      %113 = vmatprep.subr.bf16.mxu0 0
      %114 = vmatpush1.bf16.msra.mxu0 0
      %115 = vmatprep.subr.bf16.mxu0 0
      %116 = vmatpush1.bf16.msra.mxu0 0
      %117 = vmatprep.subr.bf16.mxu0 0
      %118 = vmatpush1.bf16.msra.mxu0 0
      %119 = vmatprep.subr.bf16.mxu0 0
      %120 = vmatpush1.bf16.msra.mxu0 %v100
      %121 = vmatprep.subr.bf16.mxu0 0
      %122 = vmatpush1.bf16.msra.mxu0 %v99
      %123 = vmatprep.subr.bf16.mxu0 0
      %124 = vmatpush2.bf16.msra.mxu0 0
      %125 = vmatprep.subr.bf16.mxu0 0
      %126 = vmatpush2.bf16.msra.mxu0 0
      %127 = vmatprep.subr.bf16.mxu0 0
      %128 = vmatpush2.bf16.msra.mxu0 0
      %129 = vmatprep.subr.bf16.mxu0 0
      %130 = vmatpush2.bf16.msra.mxu0 0
      %131 = vmatprep.subr.bf16.mxu0 0
      %132 = vmatpush2.bf16.msra.mxu0 0
      %133 = vmatprep.subr.bf16.mxu0 0
      %134 = vmatpush2.bf16.msra.mxu0 0
      %135 = vmatprep.subr.bf16.mxu0 0
      %136 = vmatpush2.bf16.msra.mxu0 0
      %137 = vmatprep.subr.bf16.mxu0 0
      %138 = vmatpush2.bf16.msra.mxu0 0
      %139 = vmatprep.mubr.bf16.mxu0 0
      %140 = vmatmul.mubr.bf16.gmra.mxu0 %v105
      %v141 = vpop.f32.mrf.mxu0
      %v142 = vadd.f32 %v84, %v141
      %v143 = vpop.f32.mrf.mxu0
      %v144 = vpop.f32.mrf.mxu0
      %v145 = vadd.f32 %v84, %v144
      %v146 = vpop.f32.mrf.mxu0
      %147 = vdwg.mxu0
      %v148 = vmul.f32 %v142, 0.5
      %v149 = vmul.f32 %v145, 0.5
      %v150 = vmul.f32 %v142, 0.70710677
      %v151 = vmul.f32 %v145, 0.70710677
      %v152 = vand.u32 2147483647, %v150
      %v153 = vand.u32 2147483647, %v151
      %v154 = vmul.f32 %v152, 0.3275911
      %v155 = vmul.f32 %v153, 0.3275911
      %v156 = vadd.f32 %v154, 1.0
      %v157 = vadd.f32 %v155, 1.0
      %v158 = vrcp.pop %v156
      %v159 = vmul.f32 1.0, %v158
      %v160 = vrcp.pop %v157
      %v161 = vmul.f32 1.0, %v160
      %v162 = vmul.f32 %v159, 1.0614054
      %v163 = vmul.f32 %v161, 1.0614054
      %v164 = vadd.f32 %v162, -1.4531521
      %v165 = vadd.f32 %v163, -1.4531521
      %v166 = vmul.f32 %v164, %v159
      %v167 = vmul.f32 %v165, %v161
      %v168 = vadd.f32 %v166, 1.4214138
      %v169 = vadd.f32 %v167, 1.4214138
      %v170 = vmul.f32 %v168, %v159
      %v171 = vmul.f32 %v169, %v161
      %v172 = vadd.f32 %v170, -0.28449672
      %v173 = vadd.f32 %v171, -0.28449672
      %v174 = vmul.f32 %v172, %v159
      %v175 = vmul.f32 %v173, %v161
      %v176 = vadd.f32 %v174, 0.2548296
      %v177 = vadd.f32 %v175, 0.2548296
      %v178 = vmul.f32 %v176, %v159
      %v179 = vmul.f32 %v177, %v161
      %v180 = vsub.f32 0.0, %v152
      %v181 = vsub.f32 0.0, %v153
      %v182 = vmul.f32 %v180, %v152
      %v183 = vmul.f32 %v181, %v153
      %v184 = vmul.f32 %v182, 1.442695
      %v185 = vpow.pop %v184
      %v186 = vmul.f32 %v183, 1.442695
      %v187 = vpow.pop %v186
      %v188 = vmul.f32 %v178, %v185
      %v189 = vmul.f32 %v179, %v187
      %v190 = vsub.f32 1.0, %v188
      %v191 = vsub.f32 1.0, %v189
      %vm192 = vcmp.lt.f32.partialorder %v150, 0.0
      %vm193 = vcmp.lt.f32.partialorder %v151, 0.0
      %v194 = vsub.f32 0.0, %v190
      %v195 = vsub.f32 0.0, %v191
      %v196 = vsel %vm192, %v194, %v190
      %v197 = vsel %vm193, %v195, %v191
      %v198 = vadd.f32 %v196, 1.0
      %v199 = vadd.f32 %v197, 1.0
      %v200 = vmul.f32 %v148, %v198
      %v201 = vmul.f32 %v149, %v199
      %v202 = vsel %vm103, %v200, 0.0
      %203 = vadd.xlane.f32.xlu0 %v202
      %v204 = vpop.xlane.xlu0 %203
      %v205 = vsel %vm103, %v201, 0.0
      %206 = vadd.xlane.f32.xlu0 %v205
      %v207 = vpop.xlane.xlu0 %206
      %v208 = vrcp.pop 32.0
      %v209 = vmul.f32 %v204, %v208
      %v210 = vmul.f32 %v207, %v208
      %v211 = vsub.f32 %v200, %v209
      %v212 = vsub.f32 %v201, %v210
      %v213 = vmul.f32 %v211, %v211
      %v214 = vmul.f32 %v212, %v212
      %v215 = vsel %vm103, %v213, 0.0
      %216 = vadd.xlane.f32.xlu0 %v215
      %v217 = vpop.xlane.xlu0 %216
      %v218 = vsel %vm103, %v214, 0.0
      %219 = vadd.xlane.f32.xlu0 %v218
      %v220 = vpop.xlane.xlu0 %219
      %v221 = vmul.f32 %v217, %v208
      %v222 = vmul.f32 %v220, %v208
      %v223 = vadd.f32 %v221, 1e-12
      %v224 = vadd.f32 %v222, 1e-12
      %v225 = vrsqrt.pop %v223
      %v226 = vrsqrt.pop %v224
      %v227 = vmul.f32 %v211, %v225
      %v228 = vmul.f32 %v212, %v226
      %v229 = vld [vmem:[%s3] sm:$0x1]
      %v231 = vlaneseq
      %v232 = vshrl.u32 %v231, 7
      %v233 = vsub.s32 0, %v232
      %v234 = vrot.slane %v229, %v233
      %v236 = vmul.f32 %v227, %v234
      %v237 = vmul.f32 %v228, %v234
      %v238 = vld [vmem:[%s4] sm:$0x1]
      %v240 = vlaneseq
      %v241 = vshrl.u32 %v240, 7
      %v242 = vsub.s32 0, %v241
      %v243 = vrot.slane %v238, %v242
      %v245 = vadd.f32 %v236, %v243
      %v246 = vadd.f32 %v237, %v243
      %v247 = vpack.c.bf16 %v246, %v245
      %v249 = vunpack.c.l.b16 %v247
      %v250 = vunpack.c.h.b16 %v247
      %v251 = vpack.c.b16 %v249, %v249
      %v252 = vpack.c.b16 %v250, %v250
      %vm255 = vcmask 257024
      %256 = vst.msk [vmem:[#allocation2] sm:$0xf] %vm255, %v251
      %257 = vst.msk [vmem:[#allocation2 + $0x4] sm:$0xf] %vm255, %v252
    $region45: #{tpu_custom_call.1} parent=1 // pred_fallthru
      _
    %v258 = vld [vmem:[#allocation2] sm:$0xf]
    %v259 = vld [vmem:[#allocation2 + $0x4] sm:$0xf]
    %v260 = vld [vmem:[#allocation8] sm:$0xf]
    %v261 = vld [vmem:[#allocation8 + $0x4] sm:$0xf]
    %v262 = vld [vmem:[#allocation8 + $0x8] sm:$0xf]
    %v263 = vld [vmem:[#allocation8 + $0xc] sm:$0xf]
    %v264 = vld [vmem:[%s6] sm:$0x1]
    %v266 = vlaneseq
    %v267 = vshrl.u32 %v266, 7
    %v268 = vsub.s32 0, %v267
    %v269 = vrot.slane %v264, %v268
    %v273 = vunpack.c.l.b16 %v258
    %v274 = vunpack.c.l.b16 %v259
    %v275 = vpack.c.b16 %v274, %v273
    %v280 = vunpack.c.l.b16 %v260
    %v281 = vunpack.c.l.b16 %v261
    %v282 = vunpack.c.l.b16 %v262
    %v283 = vunpack.c.l.b16 %v263
    %v284 = vpack.c.b16 %v281, %v280
    %v285 = vpack.c.b16 %v283, %v282
    %vm288 = vcmask 261120
    %v290 = vsel %vm288, %v275, 0
    %292 = vmatprep.subr.bf16.mxu0 0
    %293 = vmatpush1.bf16.msra.mxu0 0
    %294 = vmatprep.subr.bf16.mxu0 0
    %295 = vmatpush1.bf16.msra.mxu0 0
    %296 = vmatprep.subr.bf16.mxu0 0
    %297 = vmatpush1.bf16.msra.mxu0 0
    %298 = vmatprep.subr.bf16.mxu0 0
    %299 = vmatpush1.bf16.msra.mxu0 0
    %300 = vmatprep.subr.bf16.mxu0 0
    %301 = vmatpush1.bf16.msra.mxu0 0
    %302 = vmatprep.subr.bf16.mxu0 0
    %303 = vmatpush1.bf16.msra.mxu0 0
    %304 = vmatprep.subr.bf16.mxu0 0
    %305 = vmatpush1.bf16.msra.mxu0 %v285
    %306 = vmatprep.subr.bf16.mxu0 0
    %307 = vmatpush1.bf16.msra.mxu0 %v284
    %308 = vmatprep.subr.bf16.mxu0 0
    %309 = vmatpush2.bf16.msra.mxu0 0
    %310 = vmatprep.subr.bf16.mxu0 0
    %311 = vmatpush2.bf16.msra.mxu0 0
    %312 = vmatprep.subr.bf16.mxu0 0
    %313 = vmatpush2.bf16.msra.mxu0 0
    %314 = vmatprep.subr.bf16.mxu0 0
    %315 = vmatpush2.bf16.msra.mxu0 0
    %316 = vmatprep.subr.bf16.mxu0 0
    %317 = vmatpush2.bf16.msra.mxu0 0
    %318 = vmatprep.subr.bf16.mxu0 0
    %319 = vmatpush2.bf16.msra.mxu0 0
    %320 = vmatprep.subr.bf16.mxu0 0
    %321 = vmatpush2.bf16.msra.mxu0 0
    %322 = vmatprep.subr.bf16.mxu0 0
    %323 = vmatpush2.bf16.msra.mxu0 0
    %324 = vmatprep.mubr.bf16.mxu0 0
    %325 = vmatmul.mubr.bf16.gmra.mxu0 %v290
    %v326 = vpop.f32.mrf.mxu0
    %v327 = vadd.f32 %v269, %v326
    %v328 = vpop.f32.mrf.mxu0
    %v329 = vpop.f32.mrf.mxu0
    %v330 = vadd.f32 %v269, %v329
    %v331 = vpop.f32.mrf.mxu0
    %332 = vdwg.mxu0
    %v333 = vpack.c.bf16 %v330, %v327
    %v335 = vunpack.c.l.b16 %v333
    %v336 = vunpack.c.h.b16 %v333
    %v337 = vpack.c.b16 %v335, %v335
    %v338 = vpack.c.b16 %v336, %v336
    %341 = vst [vmem:[#allocation9] sm:$0xf] %v337
    %342 = vst [vmem:[#allocation9 + $0x4] sm:$0xf] %v338
    // Predicated region
    $region46: #{tpu_custom_call.1} parent=1 // pred_check
      _
    $region47: #{tpu_custom_call.1} parent=1 // pred_check_branch
      %344 = sbr.rel (0) target = $region49
    $region48: #{tpu_custom_call.1} parent=1 // pred_region
      %s346 = ssub.s32 128, 128
      %347 = vsyncadd [#allocation5], %s346
      %s348 = sshll.u32 [#allocation9], 4
      %s349 = int_to_ptr.vmem [resolvable:$true] %s348
      %354 = dma.vmem_to_hbm [thread:$0]  %s349, 128, %s7, [#allocation5], 64, 64, 4
    $region49: #{tpu_custom_call.1} parent=1 // pred_fallthru
      _
    // Predicated region
    $region50: #{tpu_custom_call.1} parent=1 // pred_check
      _
    $region51: #{tpu_custom_call.1} parent=1 // pred_check_branch
      %356 = sbr.rel (0) target = $region53
    $region52: #{tpu_custom_call.1} parent=1 // pred_region
      %357 = dma.done [#allocation5], 128
    $region53: #{tpu_custom_call.1} parent=1 // pred_fallthru
      _
    %358 = vsyncpa [#allocation4], 1
    %359 = vsyncpa [#allocation7], 1
    %360 = vsyncpa [#allocation5], 1

// kernel: tpu_custom_call.1
$region0: #{tpu_custom_call.1}
  #allocation0 [shape = 'u32[]', space=smem, size = 0x4, offset = 0x4, fixed_abs, tag = 'smem constant byte address 0x4 - core index']
  #allocation1 [shape = 'u32[144,128]{1,0:T(1,128)}', space=vmem, size = 0x12000, scoped, tag = 'internal scratch']
  #allocation2 [shape = 'bf16[16,32]{1,0:T(8,128)(2,1)}', space=vmem, size = 0x1000, scoped, tag = 'scratch operand']
  %s0 = inlined_call_operand.hbm [shape: bf16[16,32], index: 0, kind: input, shape index: {}]
  %s1 = inlined_call_operand.hbm [shape: bf16[32,32], index: 1, kind: input, shape index: {}]
  %s2 = inlined_call_operand.vmem [shape: f32[1,32], index: 2, kind: input, shape index: {}]
  %s3 = inlined_call_operand.vmem [shape: f32[1,32], index: 3, kind: input, shape index: {}]
  %s4 = inlined_call_operand.vmem [shape: f32[1,32], index: 4, kind: input, shape index: {}]
  %s5 = inlined_call_operand.hbm [shape: bf16[32,128], index: 5, kind: input, shape index: {}]
  %s6 = inlined_call_operand.vmem [shape: f32[1,128], index: 6, kind: input, shape index: {}]
  %s7 = inlined_call_operand.hbm [shape: bf16[16,128], index: 7, kind: output, shape index: {}]
  %s8 = sld [smem:[#allocation0]]
  $region54: #{tpu_custom_call.1} parent=0
    _
  %s10 = ssub.s32 1, %s8
  %s11 = scalar_select 0, %s10, %s8
  $region1: #{tpu_custom_call.1} parent=0
    #allocation3 [shape = 'u8[4096]{0}', space=vmem, size = 0x1000, scoped, tag = 'input window, operand 0, single buffered']
    #allocation4 [shape = 's32[1]{0}', space=sflag, size = 0x4, scoped, tag = 'scoped memory for tpu_custom_call.1']
    #allocation5 [shape = 's32[1]{0}', space=sflag, size = 0x4, scoped, tag = 'scoped memory for tpu_custom_call.1']
    #allocation6 [shape = 'u8[8192]{0}', space=vmem, size = 0x2000, scoped, tag = 'input window, operand 1, single buffered']
    #allocation7 [shape = 's32[1]{0}', space=sflag, size = 0x4, scoped, tag = 'scoped memory for tpu_custom_call.1']
    #allocation8 [shape = 'u8[8192]{0}', space=vmem, size = 0x2000, scoped, tag = 'input window, operand 5, single buffered']
    #allocation9 [shape = 'u8[4096]{0}', space=vmem, size = 0x1000, scoped, tag = 'output window, operand 0, single buffered']
    %12 = vsyncpa [#allocation4], 0
    %13 = vsyncpa [#allocation7], 0
    %14 = vsyncpa [#allocation5], 0
    // Predicated region
    $region2: #{tpu_custom_call.1} parent=1 // pred_check
      _
    $region3: #{tpu_custom_call.1} parent=1 // pred_check_branch
      %16 = sbr.rel (0) target = $region5
    $region4: #{tpu_custom_call.1} parent=1 // pred_region
      %s18 = ssub.s32 128, 128
      %19 = vsyncadd [#allocation4], %s18
      %s20 = sshll.u32 [#allocation3], 4
      %s21 = int_to_ptr.vmem [resolvable:$true] %s20
      %26 = dma.hbm_to_vmem [thread:$0]  %s0, 128, %s21, [#allocation4], 64, 64, 4
    $region5: #{tpu_custom_call.1} parent=1 // pred_fallthru
      _
    // Predicated region
    $region6: #{tpu_custom_call.1} parent=1 // pred_check
      _
    $region7: #{tpu_custom_call.1} parent=1 // pred_check_branch
      %28 = sbr.rel (0) target = $region9
    $region8: #{tpu_custom_call.1} parent=1 // pred_region
      %s30 = ssub.s32 256, 256
      %31 = vsyncadd [#allocation7], %s30
      %s32 = sshll.u32 [#allocation6], 4
      %s33 = int_to_ptr.vmem [resolvable:$true] %s32
      %38 = dma.hbm_to_vmem [thread:$0]  %s1, 256, %s33, [#allocation7], 64, 64, 4
    $region9: #{tpu_custom_call.1} parent=1 // pred_fallthru
      _
    // Predicated region
    $region10: #{tpu_custom_call.1} parent=1 // pred_check
      _
    $region11: #{tpu_custom_call.1} parent=1 // pred_check_branch
      %40 = sbr.rel (0) target = $region13
    $region12: #{tpu_custom_call.1} parent=1 // pred_region
      _
    $region13: #{tpu_custom_call.1} parent=1 // pred_fallthru
      _
    // Predicated region
    $region14: #{tpu_custom_call.1} parent=1 // pred_check
      _
    $region15: #{tpu_custom_call.1} parent=1 // pred_check_branch
      %42 = sbr.rel (0) target = $region17
    $region16: #{tpu_custom_call.1} parent=1 // pred_region
      _
    $region17: #{tpu_custom_call.1} parent=1 // pred_fallthru
      _
    // Predicated region
    $region18: #{tpu_custom_call.1} parent=1 // pred_check
      _
    $region19: #{tpu_custom_call.1} parent=1 // pred_check_branch
      %44 = sbr.rel (0) target = $region21
    $region20: #{tpu_custom_call.1} parent=1 // pred_region
      _
    $region21: #{tpu_custom_call.1} parent=1 // pred_fallthru
      _
    // Predicated region
    $region22: #{tpu_custom_call.1} parent=1 // pred_check
      _
    $region23: #{tpu_custom_call.1} parent=1 // pred_check_branch
      %46 = sbr.rel (0) target = $region25
    $region24: #{tpu_custom_call.1} parent=1 // pred_region
      %s48 = ssub.s32 256, 256
      %49 = vsyncadd [#allocation7], %s48
      %s50 = sshll.u32 [#allocation8], 4
      %s51 = int_to_ptr.vmem [resolvable:$true] %s50
      %56 = dma.hbm_to_vmem [thread:$0]  %s5, 256, %s51, [#allocation7], 64, 64, 4
    $region25: #{tpu_custom_call.1} parent=1 // pred_fallthru
      _
    // Predicated region
    $region26: #{tpu_custom_call.1} parent=1 // pred_check
      _
    $region27: #{tpu_custom_call.1} parent=1 // pred_check_branch
      %58 = sbr.rel (0) target = $region29
    $region28: #{tpu_custom_call.1} parent=1 // pred_region
      _
    $region29: #{tpu_custom_call.1} parent=1 // pred_fallthru
      _
    // Predicated region
    $region30: #{tpu_custom_call.1} parent=1 // pred_check
      _
    $region31: #{tpu_custom_call.1} parent=1 // pred_check_branch
      %60 = sbr.rel (0) target = $region33
    $region32: #{tpu_custom_call.1} parent=1 // pred_region
      %61 = dma.done [#allocation4], 128
    $region33: #{tpu_custom_call.1} parent=1 // pred_fallthru
      _
    // Predicated region
    $region34: #{tpu_custom_call.1} parent=1 // pred_check
      _
    $region35: #{tpu_custom_call.1} parent=1 // pred_check_branch
      %63 = sbr.rel (0) target = $region37
    $region36: #{tpu_custom_call.1} parent=1 // pred_region
      %64 = dma.done [#allocation7], 256
    $region37: #{tpu_custom_call.1} parent=1 // pred_fallthru
      _
    // Predicated region
    $region38: #{tpu_custom_call.1} parent=1 // pred_check
      _
    $region39: #{tpu_custom_call.1} parent=1 // pred_check_branch
      %66 = sbr.rel (0) target = $region41
    $region40: #{tpu_custom_call.1} parent=1 // pred_region
      %67 = dma.done [#allocation7], 256
    $region41: #{tpu_custom_call.1} parent=1 // pred_fallthru
      _
    %p69 = scmp.eq.s32.totalorder 0, 0
    // Predicated region
    $region42: #{tpu_custom_call.1} parent=1 // pred_check
      %p70 = pneg %p69
    $region43: #{tpu_custom_call.1} parent=1 // pred_check_branch
      %72 = sbr.rel (%p70) target = $region45
    $region44: #{tpu_custom_call.1} parent=1 // pred_region
      %v73 = vld [vmem:[#allocation3] sm:$0xf]
      %v74 = vld [vmem:[#allocation3 + $0x4] sm:$0xf]
      %v75 = vld [vmem:[#allocation6] sm:$0xf]
      %v76 = vld [vmem:[#allocation6 + $0x4] sm:$0xf]
      %v77 = vld [vmem:[#allocation6 + $0x8] sm:$0xf]
      %v78 = vld [vmem:[#allocation6 + $0xc] sm:$0xf]
      %v79 = vld [vmem:[%s2] sm:$0x1]
      %v81 = vlaneseq
      %v82 = vshrl.u32 %v81, 7
      %v83 = vsub.s32 0, %v82
      %v84 = vrot.slane %v79, %v83
      %v88 = vunpack.c.l.b16 %v73
      %v89 = vunpack.c.l.b16 %v74
      %v90 = vpack.c.b16 %v89, %v88
      %v95 = vunpack.c.l.b16 %v75
      %v96 = vunpack.c.l.b16 %v76
      %v97 = vunpack.c.l.b16 %v77
      %v98 = vunpack.c.l.b16 %v78
      %v99 = vpack.c.b16 %v96, %v95
      %v100 = vpack.c.b16 %v98, %v97
      %vm103 = vcmask 261120
      %v105 = vsel %vm103, %v90, 0
      %107 = vmatprep.subr.bf16.mxu0 0
      %108 = vmatpush1.bf16.msra.mxu0 0
      %109 = vmatprep.subr.bf16.mxu0 0
      %110 = vmatpush1.bf16.msra.mxu0 0
      %111 = vmatprep.subr.bf16.mxu0 0
      %112 = vmatpush1.bf16.msra.mxu0 0
      %113 = vmatprep.subr.bf16.mxu0 0
      %114 = vmatpush1.bf16.msra.mxu0 0
      %115 = vmatprep.subr.bf16.mxu0 0
      %116 = vmatpush1.bf16.msra.mxu0 0
      %117 = vmatprep.subr.bf16.mxu0 0
      %118 = vmatpush1.bf16.msra.mxu0 0
      %119 = vmatprep.subr.bf16.mxu0 0
      %120 = vmatpush1.bf16.msra.mxu0 %v100
      %121 = vmatprep.subr.bf16.mxu0 0
      %122 = vmatpush1.bf16.msra.mxu0 %v99
      %123 = vmatprep.subr.bf16.mxu0 0
      %124 = vmatpush2.bf16.msra.mxu0 0
      %125 = vmatprep.subr.bf16.mxu0 0
      %126 = vmatpush2.bf16.msra.mxu0 0
      %127 = vmatprep.subr.bf16.mxu0 0
      %128 = vmatpush2.bf16.msra.mxu0 0
      %129 = vmatprep.subr.bf16.mxu0 0
      %130 = vmatpush2.bf16.msra.mxu0 0
      %131 = vmatprep.subr.bf16.mxu0 0
      %132 = vmatpush2.bf16.msra.mxu0 0
      %133 = vmatprep.subr.bf16.mxu0 0
      %134 = vmatpush2.bf16.msra.mxu0 0
      %135 = vmatprep.subr.bf16.mxu0 0
      %136 = vmatpush2.bf16.msra.mxu0 0
      %137 = vmatprep.subr.bf16.mxu0 0
      %138 = vmatpush2.bf16.msra.mxu0 0
      %139 = vmatprep.mubr.bf16.mxu0 0
      %140 = vmatmul.mubr.bf16.gmra.mxu0 %v105
      %v141 = vpop.f32.mrf.mxu0
      %v142 = vadd.f32 %v84, %v141
      %v143 = vpop.f32.mrf.mxu0
      %v144 = vpop.f32.mrf.mxu0
      %v145 = vadd.f32 %v84, %v144
      %v146 = vpop.f32.mrf.mxu0
      %147 = vdwg.mxu0
      %v148 = vmul.f32 %v142, 0.5
      %v149 = vmul.f32 %v145, 0.5
      %v150 = vmul.f32 %v142, 0.70710677
      %v151 = vmul.f32 %v145, 0.70710677
      %v152 = vand.u32 2147483647, %v150
      %v153 = vand.u32 2147483647, %v151
      %v154 = vmul.f32 %v152, 0.3275911
      %v155 = vmul.f32 %v153, 0.3275911
      %v156 = vadd.f32 %v154, 1.0
      %v157 = vadd.f32 %v155, 1.0
      %v158 = vrcp.pop %v156
      %v159 = vmul.f32 1.0, %v158
      %v160 = vrcp.pop %v157
      %v161 = vmul.f32 1.0, %v160
      %v162 = vmul.f32 %v159, 1.0614054
      %v163 = vmul.f32 %v161, 1.0614054
      %v164 = vadd.f32 %v162, -1.4531521
      %v165 = vadd.f32 %v163, -1.4531521
      %v166 = vmul.f32 %v164, %v159
      %v167 = vmul.f32 %v165, %v161
      %v168 = vadd.f32 %v166, 1.4214138
      %v169 = vadd.f32 %v167, 1.4214138
      %v170 = vmul.f32 %v168, %v159
      %v171 = vmul.f32 %v169, %v161
      %v172 = vadd.f32 %v170, -0.28449672
      %v173 = vadd.f32 %v171, -0.28449672
      %v174 = vmul.f32 %v172, %v159
      %v175 = vmul.f32 %v173, %v161
      %v176 = vadd.f32 %v174, 0.2548296
      %v177 = vadd.f32 %v175, 0.2548296
      %v178 = vmul.f32 %v176, %v159
      %v179 = vmul.f32 %v177, %v161
      %v180 = vsub.f32 0.0, %v152
      %v181 = vsub.f32 0.0, %v153
      %v182 = vmul.f32 %v180, %v152
      %v183 = vmul.f32 %v181, %v153
      %v184 = vmul.f32 %v182, 1.442695
      %v185 = vpow.pop %v184
      %v186 = vmul.f32 %v183, 1.442695
      %v187 = vpow.pop %v186
      %v188 = vmul.f32 %v178, %v185
      %v189 = vmul.f32 %v179, %v187
      %v190 = vsub.f32 1.0, %v188
      %v191 = vsub.f32 1.0, %v189
      %vm192 = vcmp.lt.f32.partialorder %v150, 0.0
      %vm193 = vcmp.lt.f32.partialorder %v151, 0.0
      %v194 = vsub.f32 0.0, %v190
      %v195 = vsub.f32 0.0, %v191
      %v196 = vsel %vm192, %v194, %v190
      %v197 = vsel %vm193, %v195, %v191
      %v198 = vadd.f32 %v196, 1.0
      %v199 = vadd.f32 %v197, 1.0
      %v200 = vmul.f32 %v148, %v198
      %v201 = vmul.f32 %v149, %v199
      %v202 = vsel %vm103, %v200, 0.0
      %203 = vadd.xlane.f32.xlu0 %v202
      %v204 = vpop.xlane.xlu0 %203
      %v205 = vsel %vm103, %v201, 0.0
      %206 = vadd.xlane.f32.xlu0 %v205
      %v207 = vpop.xlane.xlu0 %206
      %v208 = vrcp.pop 32.0
      %v209 = vmul.f32 %v204, %v208
      %v210 = vmul.f32 %v207, %v208
      %v211 = vsub.f32 %v200, %v209
      %v212 = vsub.f32 %v201, %v210
      %v213 = vmul.f32 %v211, %v211
      %v214 = vmul.f32 %v212, %v212
      %v215 = vsel %vm103, %v213, 0.0
      %216 = vadd.xlane.f32.xlu0 %v215
      %v217 = vpop.xlane.xlu0 %216
      %v218 = vsel %vm103, %v214, 0.0
      %219 = vadd.xlane.f32.xlu0 %v218
      %v220 = vpop.xlane.xlu0 %219
      %v221 = vmul.f32 %v217, %v208
      %v222 = vmul.f32 %v220, %v208
      %v223 = vadd.f32 %v221, 1e-12
      %v224 = vadd.f32 %v222, 1e-12
      %v225 = vrsqrt.pop %v223
      %v226 = vrsqrt.pop %v224
      %v227 = vmul.f32 %v211, %v225
      %v228 = vmul.f32 %v212, %v226
      %v229 = vld [vmem:[%s3] sm:$0x1]
      %v231 = vlaneseq
      %v232 = vshrl.u32 %v231, 7
      %v233 = vsub.s32 0, %v232
      %v234 = vrot.slane %v229, %v233
      %v236 = vmul.f32 %v227, %v234
      %v237 = vmul.f32 %v228, %v234
      %v238 = vld [vmem:[%s4] sm:$0x1]
      %v240 = vlaneseq
      %v241 = vshrl.u32 %v240, 7
      %v242 = vsub.s32 0, %v241
      %v243 = vrot.slane %v238, %v242
      %v245 = vadd.f32 %v236, %v243
      %v246 = vadd.f32 %v237, %v243
      %v247 = vpack.c.bf16 %v246, %v245
      %v249 = vunpack.c.l.b16 %v247
      %v250 = vunpack.c.h.b16 %v247
      %v251 = vpack.c.b16 %v249, %v249
      %v252 = vpack.c.b16 %v250, %v250
      %vm255 = vcmask 257024
      %256 = vst.msk [vmem:[#allocation2] sm:$0xf] %vm255, %v251
      %257 = vst.msk [vmem:[#allocation2 + $0x4] sm:$0xf] %vm255, %v252
    $region45: #{tpu_custom_call.1} parent=1 // pred_fallthru
      _
    %v258 = vld [vmem:[#allocation2] sm:$0xf]
    %v259 = vld [vmem:[#allocation2 + $0x4] sm:$0xf]
    %v260 = vld [vmem:[#allocation8] sm:$0xf]
    %v261 = vld [vmem:[#allocation8 + $0x4] sm:$0xf]
    %v262 = vld [vmem:[#allocation8 + $0x8] sm:$0xf]
    %v263 = vld [vmem:[#allocation8 + $0xc] sm:$0xf]
    %v264 = vld [vmem:[%s6] sm:$0x1]
    %v266 = vlaneseq
    %v267 = vshrl.u32 %v266, 7
    %v268 = vsub.s32 0, %v267
    %v269 = vrot.slane %v264, %v268
    %v273 = vunpack.c.l.b16 %v258
    %v274 = vunpack.c.l.b16 %v259
    %v275 = vpack.c.b16 %v274, %v273
    %v280 = vunpack.c.l.b16 %v260
    %v281 = vunpack.c.l.b16 %v261
    %v282 = vunpack.c.l.b16 %v262
    %v283 = vunpack.c.l.b16 %v263
    %v284 = vpack.c.b16 %v281, %v280
    %v285 = vpack.c.b16 %v283, %v282
    %vm288 = vcmask 261120
    %v290 = vsel %vm288, %v275, 0
    %292 = vmatprep.subr.bf16.mxu0 0
    %293 = vmatpush1.bf16.msra.mxu0 0
    %294 = vmatprep.subr.bf16.mxu0 0
    %295 = vmatpush1.bf16.msra.mxu0 0
    %296 = vmatprep.subr.bf16.mxu0 0
    %297 = vmatpush1.bf16.msra.mxu0 0
    %298 = vmatprep.subr.bf16.mxu0 0
    %299 = vmatpush1.bf16.msra.mxu0 0
    %300 = vmatprep.subr.bf16.mxu0 0
    %301 = vmatpush1.bf16.msra.mxu0 0
    %302 = vmatprep.subr.bf16.mxu0 0
    %303 = vmatpush1.bf16.msra.mxu0 0
    %304 = vmatprep.subr.bf16.mxu0 0
    %305 = vmatpush1.bf16.msra.mxu0 %v285
    %306 = vmatprep.subr.bf16.mxu0 0
    %307 = vmatpush1.bf16.msra.mxu0 %v284
    %308 = vmatprep.subr.bf16.mxu0 0
    %309 = vmatpush2.bf16.msra.mxu0 0
    %310 = vmatprep.subr.bf16.mxu0 0
    %311 = vmatpush2.bf16.msra.mxu0 0
    %312 = vmatprep.subr.bf16.mxu0 0
    %313 = vmatpush2.bf16.msra.mxu0 0
    %314 = vmatprep.subr.bf16.mxu0 0
    %315 = vmatpush2.bf16.msra.mxu0 0
    %316 = vmatprep.subr.bf16.mxu0 0
    %317 = vmatpush2.bf16.msra.mxu0 0
    %318 = vmatprep.subr.bf16.mxu0 0
    %319 = vmatpush2.bf16.msra.mxu0 0
    %320 = vmatprep.subr.bf16.mxu0 0
    %321 = vmatpush2.bf16.msra.mxu0 0
    %322 = vmatprep.subr.bf16.mxu0 0
    %323 = vmatpush2.bf16.msra.mxu0 0
    %324 = vmatprep.mubr.bf16.mxu0 0
    %325 = vmatmul.mubr.bf16.gmra.mxu0 %v290
    %v326 = vpop.f32.mrf.mxu0
    %v327 = vadd.f32 %v269, %v326
    %v328 = vpop.f32.mrf.mxu0
    %v329 = vpop.f32.mrf.mxu0
    %v330 = vadd.f32 %v269, %v329
    %v331 = vpop.f32.mrf.mxu0
    %332 = vdwg.mxu0
    %v333 = vpack.c.bf16 %v330, %v327
    %v335 = vunpack.c.l.b16 %v333
    %v336 = vunpack.c.h.b16 %v333
    %v337 = vpack.c.b16 %v335, %v335
    %v338 = vpack.c.b16 %v336, %v336
    %341 = vst [vmem:[#allocation9] sm:$0xf] %v337
    %342 = vst [vmem:[#allocation9 + $0x4] sm:$0xf] %v338
    // Predicated region
    $region46: #{tpu_custom_call.1} parent=1 // pred_check
      _
    $region47: #{tpu_custom_call.1} parent=1 // pred_check_branch
      %344 = sbr.rel (0) target = $region49
    $region48: #{tpu_custom_call.1} parent=1 // pred_region
      %s346 = ssub.s32 128, 128
      %347 = vsyncadd [#allocation5], %s346
      %s348 = sshll.u32 [#allocation9], 4
      %s349 = int_to_ptr.vmem [resolvable:$true] %s348
      %354 = dma.vmem_to_hbm [thread:$0]  %s349, 128, %s7, [#allocation5], 64, 64, 4
    $region49: #{tpu_custom_call.1} parent=1 // pred_fallthru
      _
    // Predicated region
    $region50: #{tpu_custom_call.1} parent=1 // pred_check
      _
    $region51: #{tpu_custom_call.1} parent=1 // pred_check_branch
      %356 = sbr.rel (0) target = $region53
    $region52: #{tpu_custom_call.1} parent=1 // pred_region
      %357 = dma.done [#allocation5], 128
    $region53: #{tpu_custom_call.1} parent=1 // pred_fallthru
      _
    %358 = vsyncpa [#allocation4], 1
    %359 = vsyncpa [#allocation7], 1
    %360 = vsyncpa [#allocation5], 1

</llo_original>
